<compile_context>
chip_gen: v7x
topology: tpu7x:2x2x1
jax: 0.10.0
libtpu: 0.0.40
codegen_flags: <defaults>
</compile_context>

<pallas_src>
import jax
import jax.numpy as jnp
from jax.experimental import pallas as pl
from jax.experimental.pallas import tpu as pltpu


# ------------------------------ Pallas kernel -------------------------------
def _channel_attention_kernel(x_ref, w1_ref, w2_ref, o_ref):
    """Fused ChannelAttention for a block of Nb images.

    x_ref : (Nb, C, HW)  input tile; lane (fast) axis = HW
    w1_ref: (Cr, C)      fc[0] weight  (Conv2d(C, Cr, 1, bias=False), (out, in))
    w2_ref: (C, Cr)      fc[2] weight  (Conv2d(Cr, C, 1, bias=False), (out, in))
    o_ref : (Nb, C, HW)
    """
    x = x_ref[...]                                          # (Nb, C, HW) f32, lane-dense
    nb = x.shape[0]

    # Global pooling over the spatial (lane) axis -> (Nb, C).  XLU reduce.
    avg = jnp.mean(x, axis=-1)                              # (Nb, C)
    mx = jnp.max(x, axis=-1)                                # (Nb, C)

    # Fused FC for both pooled branches: one (2*Nb, C) operand instead of four matvecs.
    p = jnp.concatenate([avg, mx], axis=0)                  # (2*Nb, C)
    h = jax.lax.dot_general(p, w1_ref[...], (((1,), (1,)), ((), ())),
                            preferred_element_type=jnp.float32)   # (2*Nb, Cr)
    h = jnp.maximum(h, 0.0)
    y = jax.lax.dot_general(h, w2_ref[...], (((1,), (1,)), ((), ())),
                            preferred_element_type=jnp.float32)   # (2*Nb, C)

    att = jax.nn.sigmoid(y[:nb] + y[nb:])                   # (Nb, C), EUP sigmoid
    o_ref[...] = x * att[:, :, None]                        # lane-broadcast gate, single store


# ------------------------------ JAX wrapper ---------------------------------
def channel_attention(x_nchw, w1, w2, *, target_tile_bytes=2 << 20):
    """x: (N, C, H, W) f32; w1: (C//r, C); w2: (C, C//r). Returns (N, C, H, W)."""
    N, C, H, W = x_nchw.shape
    Cr = w1.shape[0]
    HW = H * W
    x2 = x_nchw.reshape(N, C, HW)          # free row-major reshape, no transpose

    # Batch images per grid step so each tile is ~target_tile_bytes (and divides N).
    per_image_bytes = C * HW * 4
    nb = max(1, min(N, target_tile_bytes // per_image_bytes))
    while N % nb:
        nb -= 1
    grid = (N // nb,)

    cost = pl.CostEstimate(
        flops=4 * N * C * Cr + 3 * N * C * HW,          # tiny FCs + pool/gate elementwise
        transcendentals=N * C,                          # sigmoid
        bytes_accessed=2 * N * C * HW * 4 + 2 * C * Cr * 4,
    )

    out = pl.pallas_call(
        _channel_attention_kernel,
        out_shape=jax.ShapeDtypeStruct((N, C, HW), jnp.float32),
        grid=grid,
        in_specs=[
            pl.BlockSpec((nb, C, HW), lambda n: (n, 0, 0)),
            pl.BlockSpec((Cr, C), lambda n: (0, 0)),     # constant index -> weights stay resident
            pl.BlockSpec((C, Cr), lambda n: (0, 0)),
        ],
        out_specs=pl.BlockSpec((nb, C, HW), lambda n: (n, 0, 0)),
        compiler_params=pltpu.CompilerParams(dimension_semantics=("parallel",)),
        cost_estimate=cost,
    )(x2, w1, w2)
    return out.reshape(N, C, H, W)


# --------------------------- pure-JAX reference -----------------------------
def channel_attention_ref(x, w1, w2):
    avg = jnp.mean(x, axis=(2, 3))                          # (N, C)
    mx = jnp.max(x, axis=(2, 3))                            # (N, C)

    def fc(v):                                              # (N, C) -> (N, C)
        return jnp.maximum(v @ w1.T, 0.0) @ w2.T

    att = jax.nn.sigmoid(fc(avg) + fc(mx))                  # (N, C)
    return x * att[:, :, None, None]


# ---------------------------------- main ------------------------------------
if __name__ == "__main__":
    N, CHANNELS, H, W = 2, 32, 16, 16
    REDUCTION = 16
    CR = CHANNELS // REDUCTION

    key = jax.random.PRNGKey(0)
    kx, k1, k2 = jax.random.split(key, 3)
    x = jax.random.normal(kx, (N, CHANNELS, H, W), jnp.float32)
    # PyTorch Conv2d(.., 1, bias=False).weight[:, :, 0, 0] layout: (out_ch, in_ch)
    w1 = jax.random.normal(k1, (CR, CHANNELS), jnp.float32) * (1.0 / CHANNELS ** 0.5)
    w2 = jax.random.normal(k2, (CHANNELS, CR), jnp.float32) * (1.0 / CR ** 0.5)

    out = jax.jit(channel_attention)(x, w1, w2)
    jax.block_until_ready(out)

    ref = channel_attention_ref(x, w1, w2)
    assert out.shape == (N, CHANNELS, H, W), out.shape
    assert jnp.allclose(out, ref, atol=1e-5, rtol=1e-5), float(jnp.max(jnp.abs(out - ref)))
    print("KERNEL_OK")
</pallas_src>

<mosaic_0001>
module attributes {stable_mosaic.version = 11 : i64} {
  func.func @_channel_attention_kernel(%arg0: i32, %arg1: memref<2x32x256xf32, #tpu.memory_space<vmem>>, %arg2: memref<2x32xf32, #tpu.memory_space<vmem>>, %arg3: memref<32x2xf32, #tpu.memory_space<vmem>>, %arg4: memref<2x32x256xf32, #tpu.memory_space<vmem>>) attributes {dimension_semantics = [#tpu.dimension_semantics<parallel>], iteration_bounds = array<i64: 1>, scalar_prefetch = 0 : i64, scratch_operands = 0 : i64, tpu.core_type = #tpu.core_type<tc>, window_params = [{transform_indices = @transform_0, window_bounds = array<i64: 2, 32, 256>}, {pipeline_mode = #tpu.pipeline_mode<synchronous>, transform_indices = @transform_1, window_bounds = array<i64: 2, 32>}, {pipeline_mode = #tpu.pipeline_mode<synchronous>, transform_indices = @transform_2, window_bounds = array<i64: 32, 2>}, {transform_indices = @transform_3, window_bounds = array<i64: 2, 32, 256>}]} {
    %c0 = arith.constant 0 : index
    %c0_0 = arith.constant 0 : index
    %c0_1 = arith.constant 0 : index
    %0 = vector.load %arg1[%c0, %c0_0, %c0_1] : memref<2x32x256xf32, #tpu.memory_space<vmem>>, vector<2x32x256xf32>
    %cst = arith.constant dense<0.000000e+00> : vector<2x32xf32>
    %1 = vector.multi_reduction <add>, %0, %cst [2] : vector<2x32x256xf32> to vector<2x32xf32>
    %cst_2 = arith.constant 2.560000e+02 : f32
    %2 = vector.broadcast %cst_2 : f32 to vector<2x32xf32>
    %3 = arith.divf %1, %2 : vector<2x32xf32>
    %cst_3 = arith.constant dense<0xFF800000> : vector<2x32xf32>
    %4 = vector.multi_reduction <maximumf>, %0, %cst_3 [2] : vector<2x32x256xf32> to vector<2x32xf32>
    %5 = tpu.concatenate %3, %4 in 0 : vector<2x32xf32>, vector<2x32xf32> -> vector<4x32xf32>
    %c0_4 = arith.constant 0 : index
    %c0_5 = arith.constant 0 : index
    %6 = vector.load %arg2[%c0_4, %c0_5] : memref<2x32xf32, #tpu.memory_space<vmem>>, vector<2x32xf32>
    %cst_6 = arith.constant dense<0.000000e+00> : vector<4x2xf32>
    %7 = tpu.matmul %5, %6, %cst_6 {dimension_numbers = #tpu.dot_dimension_numbers<[1], [1], [0], [0], [0, 0, 1, 0], [], []>} : vector<4x32xf32>, vector<2x32xf32>, vector<4x2xf32> -> vector<4x2xf32>
    %cst_7 = arith.constant 0.000000e+00 : f32
    %8 = vector.broadcast %cst_7 : f32 to vector<4x2xf32>
    %9 = arith.maximumf %7, %8 : vector<4x2xf32>
    %c0_8 = arith.constant 0 : index
    %c0_9 = arith.constant 0 : index
    %10 = vector.load %arg3[%c0_8, %c0_9] : memref<32x2xf32, #tpu.memory_space<vmem>>, vector<32x2xf32>
    %cst_10 = arith.constant dense<0.000000e+00> : vector<4x32xf32>
    %11 = tpu.matmul %9, %10, %cst_10 {dimension_numbers = #tpu.dot_dimension_numbers<[1], [1], [0], [0], [0, 0, 1, 0], [], []>} : vector<4x2xf32>, vector<32x2xf32>, vector<4x32xf32> -> vector<4x32xf32>
    %12 = vector.extract_strided_slice %11 {offsets = [0, 0], sizes = [2, 32], strides = [1, 1]} : vector<4x32xf32> to vector<2x32xf32>
    %13 = vector.extract_strided_slice %11 {offsets = [2, 0], sizes = [2, 32], strides = [1, 1]} : vector<4x32xf32> to vector<2x32xf32>
    %14 = arith.addf %12, %13 : vector<2x32xf32>
    %15 = arith.negf %14 : vector<2x32xf32>
    %16 = math.exp %15 : vector<2x32xf32>
    %cst_11 = arith.constant 1.000000e+00 : f32
    %17 = vector.broadcast %cst_11 : f32 to vector<2x32xf32>
    %18 = arith.addf %17, %16 : vector<2x32xf32>
    %19 = arith.divf %17, %18 : vector<2x32xf32>
    %20 = vector.shape_cast %19 : vector<2x32xf32> to vector<2x32x1xf32>
    %21 = vector.broadcast %20 : vector<2x32x1xf32> to vector<2x32x256xf32>
    %22 = arith.mulf %0, %21 : vector<2x32x256xf32>
    %c0_12 = arith.constant 0 : index
    %c0_13 = arith.constant 0 : index
    %c0_14 = arith.constant 0 : index
    %23 = vector.load %arg4[%c0_12, %c0_13, %c0_14] : memref<2x32x256xf32, #tpu.memory_space<vmem>>, vector<2x32x256xf32>
    tpu.vector_store %arg4[%c0_12, %c0_13, %c0_14], %22 {strides = array<i32>} : memref<2x32x256xf32, #tpu.memory_space<vmem>>, vector<2x32x256xf32>,
    return
  }
  func.func @transform_0(%arg0: i32) -> (i32, i32, i32) {
    %c0_i32 = arith.constant 0 : i32
    %c0_i32_0 = arith.constant 0 : i32
    %c0_i32_1 = arith.constant 0 : i32
    return %arg0, %c0_i32, %c0_i32_0 : i32, i32, i32
  }
  func.func @transform_1(%arg0: i32) -> (i32, i32) {
    %c0_i32 = arith.constant 0 : i32
    %c0_i32_0 = arith.constant 0 : i32
    %c0_i32_1 = arith.constant 0 : i32
    return %c0_i32, %c0_i32_0 : i32, i32
  }
  func.func @transform_2(%arg0: i32) -> (i32, i32) {
    %c0_i32 = arith.constant 0 : i32
    %c0_i32_0 = arith.constant 0 : i32
    %c0_i32_1 = arith.constant 0 : i32
    return %c0_i32, %c0_i32_0 : i32, i32
  }
  func.func @transform_3(%arg0: i32) -> (i32, i32, i32) {
    %c0_i32 = arith.constant 0 : i32
    %c0_i32_0 = arith.constant 0 : i32
    %c0_i32_1 = arith.constant 0 : i32
    return %arg0, %c0_i32, %c0_i32_0 : i32, i32, i32
  }
}

</mosaic_0001>

<llo_original>
// kernel: channel_attention.1
$region0: #{channel_attention.1}
  #allocation0 [shape = 'u32[]', space=smem, size = 0x4, offset = 0x4, fixed_abs, tag = 'smem constant byte address 0x4 - core index']
  #allocation1 [shape = 'u32[144,128]{1,0:T(1,128)}', space=vmem, size = 0x12000, scoped, tag = 'internal scratch']
  %s0 = inlined_call_operand.vmem [shape: f32[2,32,256], index: 0, kind: input, shape index: {}]
  %s1 = inlined_call_operand.vmem [shape: f32[2,32], index: 1, kind: input, shape index: {}]
  %s2 = inlined_call_operand.vmem [shape: f32[32,2], index: 2, kind: input, shape index: {}]
  %s3 = inlined_call_operand.vmem [shape: f32[2,32,256], index: 3, kind: output, shape index: {}]
  %s4 = sld [smem:[#allocation0]]
  $region22: #{channel_attention.1} parent=0
    _
  %s6 = ssub.s32 1, %s4
  %s7 = scalar_select 0, %s6, %s4
  // Predicated region
  $region2: #{channel_attention.1} parent=0 // pred_check
    _
  $region3: #{channel_attention.1} parent=0 // pred_check_branch
    %9 = sbr.rel (0) target = $region5
  $region4: #{channel_attention.1} parent=0 // pred_region
    _
  $region5: #{channel_attention.1} parent=0 // pred_fallthru
    _
  // Predicated region
  $region6: #{channel_attention.1} parent=0 // pred_check
    _
  $region7: #{channel_attention.1} parent=0 // pred_check_branch
    %11 = sbr.rel (0) target = $region9
  $region8: #{channel_attention.1} parent=0 // pred_region
    _
  $region9: #{channel_attention.1} parent=0 // pred_fallthru
    _
  // Predicated region
  $region10: #{channel_attention.1} parent=0 // pred_check
    _
  $region11: #{channel_attention.1} parent=0 // pred_check_branch
    %13 = sbr.rel (0) target = $region13
  $region12: #{channel_attention.1} parent=0 // pred_region
    _
  $region13: #{channel_attention.1} parent=0 // pred_fallthru
    _
  %v14 = vld [vmem:[%s0] sm:$0xff]
  %v15 = vld [vmem:[%s0 + $0x8] sm:$0xff]
  %v16 = vld [vmem:[%s0 + $0x10] sm:$0xff]
  %v17 = vld [vmem:[%s0 + $0x18] sm:$0xff]
  %v18 = vld [vmem:[%s0 + $0x20] sm:$0xff]
  %v19 = vld [vmem:[%s0 + $0x28] sm:$0xff]
  %v20 = vld [vmem:[%s0 + $0x30] sm:$0xff]
  %v21 = vld [vmem:[%s0 + $0x38] sm:$0xff]
  %v22 = vld [vmem:[%s0 + $0x40] sm:$0xff]
  %v23 = vld [vmem:[%s0 + $0x48] sm:$0xff]
  %v24 = vld [vmem:[%s0 + $0x50] sm:$0xff]
  %v25 = vld [vmem:[%s0 + $0x58] sm:$0xff]
  %v26 = vld [vmem:[%s0 + $0x60] sm:$0xff]
  %v27 = vld [vmem:[%s0 + $0x68] sm:$0xff]
  %v28 = vld [vmem:[%s0 + $0x70] sm:$0xff]
  %v29 = vld [vmem:[%s0 + $0x78] sm:$0xff]
  %v30 = vadd.f32 %v14, %v15
  %31 = vadd.xlane.f32.xlu0 %v30
  %v32 = vpop.xlane.xlu0 %31
  %v33 = vadd.f32 %v16, %v17
  %34 = vadd.xlane.f32.xlu0 %v33
  %v35 = vpop.xlane.xlu0 %34
  %v36 = vadd.f32 %v18, %v19
  %37 = vadd.xlane.f32.xlu0 %v36
  %v38 = vpop.xlane.xlu0 %37
  %v39 = vadd.f32 %v20, %v21
  %40 = vadd.xlane.f32.xlu0 %v39
  %v41 = vpop.xlane.xlu0 %40
  %v42 = vadd.f32 %v22, %v23
  %43 = vadd.xlane.f32.xlu0 %v42
  %v44 = vpop.xlane.xlu0 %43
  %v45 = vadd.f32 %v24, %v25
  %46 = vadd.xlane.f32.xlu0 %v45
  %v47 = vpop.xlane.xlu0 %46
  %v48 = vadd.f32 %v26, %v27
  %49 = vadd.xlane.f32.xlu0 %v48
  %v50 = vpop.xlane.xlu0 %49
  %v51 = vadd.f32 %v28, %v29
  %52 = vadd.xlane.f32.xlu0 %v51
  %v53 = vpop.xlane.xlu0 %52
  %v54 = vrcp.pop 256.0
  %v55 = vmul.f32 %v32, %v54
  %v56 = vmul.f32 %v35, %v54
  %v57 = vmul.f32 %v38, %v54
  %v58 = vmul.f32 %v41, %v54
  %v59 = vmul.f32 %v44, %v54
  %v60 = vmul.f32 %v47, %v54
  %v61 = vmul.f32 %v50, %v54
  %v62 = vmul.f32 %v53, %v54
  %v63 = vmax.f32 %v14, %v15
  %64 = vmax.xlane.f32.xlu0 %v63
  %v65 = vpop.xlane.xlu0 %64
  %v66 = vmax.f32 %v16, %v17
  %67 = vmax.xlane.f32.xlu0 %v66
  %v68 = vpop.xlane.xlu0 %67
  %v69 = vmax.f32 %v18, %v19
  %70 = vmax.xlane.f32.xlu0 %v69
  %v71 = vpop.xlane.xlu0 %70
  %v72 = vmax.f32 %v20, %v21
  %73 = vmax.xlane.f32.xlu0 %v72
  %v74 = vpop.xlane.xlu0 %73
  %v75 = vmax.f32 %v22, %v23
  %76 = vmax.xlane.f32.xlu0 %v75
  %v77 = vpop.xlane.xlu0 %76
  %v78 = vmax.f32 %v24, %v25
  %79 = vmax.xlane.f32.xlu0 %v78
  %v80 = vpop.xlane.xlu0 %79
  %v81 = vmax.f32 %v26, %v27
  %82 = vmax.xlane.f32.xlu0 %v81
  %v83 = vpop.xlane.xlu0 %82
  %v84 = vmax.f32 %v28, %v29
  %85 = vmax.xlane.f32.xlu0 %v84
  %v86 = vpop.xlane.xlu0 %85
  %v95 = vlaneseq
  %v96 = vand.u32 %v95, 127
  %v97 = vlaneseq
  %v98 = vshrl.u32 %v97, 7
  %v99 = vsub.s32 %v96, %v98
  %v100 = vrot.slane %v55, %v99
  %v101 = vadd.s32 %v96, 4294967288
  %v102 = vlaneseq
  %v103 = vshrl.u32 %v102, 7
  %v104 = vsub.s32 %v101, %v103
  %v105 = vrot.slane %v56, %v104
  %vm106 = vcmask 130112
  %v107 = vsel %vm106, %v105, %v100
  %v108 = vadd.s32 %v96, 4294967280
  %v109 = vlaneseq
  %v110 = vshrl.u32 %v109, 7
  %v111 = vsub.s32 %v108, %v110
  %v112 = vrot.slane %v57, %v111
  %vm113 = vcmask 195712
  %v114 = vsel %vm113, %v112, %v107
  %v115 = vadd.s32 %v96, 4294967272
  %v116 = vlaneseq
  %v117 = vshrl.u32 %v116, 7
  %v118 = vsub.s32 %v115, %v117
  %v119 = vrot.slane %v58, %v118
  %vm120 = vcmask 261312
  %v121 = vsel %vm120, %v119, %v114
  %v122 = vlaneseq
  %v123 = vshrl.u32 %v122, 7
  %v124 = vsub.s32 %v96, %v123
  %v125 = vrot.slane %v59, %v124
  %v126 = vlaneseq
  %v127 = vshrl.u32 %v126, 7
  %v128 = vsub.s32 %v101, %v127
  %v129 = vrot.slane %v60, %v128
  %v130 = vsel %vm106, %v129, %v125
  %v131 = vlaneseq
  %v132 = vshrl.u32 %v131, 7
  %v133 = vsub.s32 %v108, %v132
  %v134 = vrot.slane %v61, %v133
  %v135 = vsel %vm113, %v134, %v130
  %v136 = vlaneseq
  %v137 = vshrl.u32 %v136, 7
  %v138 = vsub.s32 %v115, %v137
  %v139 = vrot.slane %v62, %v138
  %v140 = vsel %vm120, %v139, %v135
  %vm141 = vcmask 1041409
  %v142 = vsel %vm141, %v140, %v121
  %v152 = vlaneseq
  %v153 = vshrl.u32 %v152, 7
  %v154 = vsub.s32 %v96, %v153
  %v155 = vrot.slane %v65, %v154
  %v156 = vlaneseq
  %v157 = vshrl.u32 %v156, 7
  %v158 = vsub.s32 %v101, %v157
  %v159 = vrot.slane %v68, %v158
  %v160 = vsel %vm106, %v159, %v155
  %v161 = vlaneseq
  %v162 = vshrl.u32 %v161, 7
  %v163 = vsub.s32 %v108, %v162
  %v164 = vrot.slane %v71, %v163
  %v165 = vsel %vm113, %v164, %v160
  %v166 = vlaneseq
  %v167 = vshrl.u32 %v166, 7
  %v168 = vsub.s32 %v115, %v167
  %v169 = vrot.slane %v74, %v168
  %v170 = vsel %vm120, %v169, %v165
  %v171 = vlaneseq
  %v172 = vshrl.u32 %v171, 7
  %v173 = vsub.s32 %v96, %v172
  %v174 = vrot.slane %v77, %v173
  %v175 = vlaneseq
  %v176 = vshrl.u32 %v175, 7
  %v177 = vsub.s32 %v101, %v176
  %v178 = vrot.slane %v80, %v177
  %v179 = vsel %vm106, %v178, %v174
  %v180 = vlaneseq
  %v181 = vshrl.u32 %v180, 7
  %v182 = vsub.s32 %v108, %v181
  %v183 = vrot.slane %v83, %v182
  %v184 = vsel %vm113, %v183, %v179
  %v185 = vlaneseq
  %v186 = vshrl.u32 %v185, 7
  %v187 = vsub.s32 %v115, %v186
  %v188 = vrot.slane %v86, %v187
  %v189 = vsel %vm120, %v188, %v184
  %vm190 = vcmask 1043459
  %v191 = vsel %vm190, %v189, %v170
  %vm193 = vcmask 1041408
  %v194 = vsel %vm193, %v142, %v191
  %v195 = vld [vmem:[%s1] sm:$0x3]
  %vm196 = vcmask 261120
  %v198 = vsel %vm196, %v194, 0
  %v201 = vsel %vm196, %v195, 0
  %203 = vmatprep.subr.mxu0 0.0
  %204 = vmatpush1.xpose.msra.mxu0 %v201
  %205 = vmatprep.subr.mxu0 0.0
  %206 = vmatpush1.xpose.msra.mxu0 0.0
  %207 = vmatprep.subr.mxu0 0.0
  %208 = vmatpush1.xpose.msra.mxu0 0.0
  %209 = vmatprep.subr.mxu0 0.0
  %210 = vmatpush1.xpose.msra.mxu0 0.0
  %211 = vmatprep.subr.mxu0 0.0
  %212 = vmatpush1.xpose.msra.mxu0 0.0
  %213 = vmatprep.subr.mxu0 0.0
  %214 = vmatpush1.xpose.msra.mxu0 0.0
  %215 = vmatprep.subr.mxu0 0.0
  %216 = vmatpush1.xpose.msra.mxu0 0.0
  %217 = vmatprep.subr.mxu0 0.0
  %218 = vmatpush1.xpose.msra.mxu0 0.0
  %219 = vmatprep.subr.mxu0 0.0
  %220 = vmatpush1.xpose.msra.mxu0 0.0
  %221 = vmatprep.subr.mxu0 0.0
  %222 = vmatpush1.xpose.msra.mxu0 0.0
  %223 = vmatprep.subr.mxu0 0.0
  %224 = vmatpush1.xpose.msra.mxu0 0.0
  %225 = vmatprep.subr.mxu0 0.0
  %226 = vmatpush1.xpose.msra.mxu0 0.0
  %227 = vmatprep.subr.mxu0 0.0
  %228 = vmatpush1.xpose.msra.mxu0 0.0
  %229 = vmatprep.subr.mxu0 0.0
  %230 = vmatpush1.xpose.msra.mxu0 0.0
  %231 = vmatprep.subr.mxu0 0.0
  %232 = vmatpush1.xpose.msra.mxu0 0.0
  %233 = vmatprep.subr.mxu0 0.0
  %234 = vmatpush1.xpose.msra.mxu0 0.0
  %235 = vmatprep.subr.mxu0 0.0
  %236 = vmatpush1.xpose.msra.mxu0 0.0
  %237 = vmatprep.subr.mxu0 0.0
  %238 = vmatpush1.xpose.msra.mxu0 0.0
  %239 = vmatprep.subr.mxu0 0.0
  %240 = vmatpush1.xpose.msra.mxu0 0.0
  %241 = vmatprep.subr.mxu0 0.0
  %242 = vmatpush1.xpose.msra.mxu0 0.0
  %243 = vmatprep.subr.mxu0 0.0
  %244 = vmatpush1.xpose.msra.mxu0 0.0
  %245 = vmatprep.subr.mxu0 0.0
  %246 = vmatpush1.xpose.msra.mxu0 0.0
  %247 = vmatprep.subr.mxu0 0.0
  %248 = vmatpush1.xpose.msra.mxu0 0.0
  %249 = vmatprep.subr.mxu0 0.0
  %250 = vmatpush1.xpose.msra.mxu0 0.0
  %251 = vmatprep.subr.mxu0 0.0
  %252 = vmatpush1.xpose.msra.mxu0 0.0
  %253 = vmatprep.subr.mxu0 0.0
  %254 = vmatpush1.xpose.msra.mxu0 0.0
  %255 = vmatprep.subr.mxu0 0.0
  %256 = vmatpush1.xpose.msra.mxu0 0.0
  %257 = vmatprep.subr.mxu0 0.0
  %258 = vmatpush1.xpose.msra.mxu0 0.0
  %259 = vmatprep.subr.mxu0 0.0
  %260 = vmatpush1.xpose.msra.mxu0 0.0
  %261 = vmatprep.subr.mxu0 0.0
  %262 = vmatpush1.xpose.msra.mxu0 0.0
  %263 = vmatprep.subr.mxu0 0.0
  %264 = vmatpush1.xpose.msra.mxu0 0.0
  %265 = vmatprep.subr.mxu0 0.0
  %266 = vmatpush1.xpose.msra.mxu0 0.0
  %267 = vmatprep.mubr.f32.mxu0 0.0
  %268 = vmatmul.mubr.f32.gmra.mrb[0].mxu0 %v198
  %v269 = vpop.f32.mrb[0].mxu0
  %v270 = vadd.f32 0.0, %v269
  %v271 = vpop.f32.mrb[0].mxu0
  %272 = vdwg.mxu0
  %v273 = vmax.f32 %v270, 0.0
  %v274 = vld [vmem:[%s2] sm:$0xff]
  %v275 = vld [vmem:[%s2 + $0x8] sm:$0xff]
  %v276 = vld [vmem:[%s2 + $0x10] sm:$0xff]
  %v277 = vld [vmem:[%s2 + $0x18] sm:$0xff]
  %vm278 = vcmask 15360
  %v280 = vsel %vm278, %v273, 0
  %v283 = vsel %vm278, %v274, 0
  %v286 = vsel %vm278, %v275, 0
  %v289 = vsel %vm278, %v276, 0
  %v292 = vsel %vm278, %v277, 0
  %294 = vmatprep.subr.mxu0 0.0
  %295 = vmatpush1.xpose.msra.mxu0 %v283
  %296 = vmatprep.subr.mxu0 0.0
  %297 = vmatpush1.xpose.msra.mxu0 %v286
  %298 = vmatprep.subr.mxu0 0.0
  %299 = vmatpush1.xpose.msra.mxu0 %v289
  %300 = vmatprep.subr.mxu0 0.0
  %301 = vmatpush1.xpose.msra.mxu0 %v292
  %302 = vmatprep.subr.mxu0 0.0
  %303 = vmatpush1.xpose.msra.mxu0 0.0
  %304 = vmatprep.subr.mxu0 0.0
  %305 = vmatpush1.xpose.msra.mxu0 0.0
  %306 = vmatprep.subr.mxu0 0.0
  %307 = vmatpush1.xpose.msra.mxu0 0.0
  %308 = vmatprep.subr.mxu0 0.0
  %309 = vmatpush1.xpose.msra.mxu0 0.0
  %310 = vmatprep.subr.mxu0 0.0
  %311 = vmatpush1.xpose.msra.mxu0 0.0
  %312 = vmatprep.subr.mxu0 0.0
  %313 = vmatpush1.xpose.msra.mxu0 0.0
  %314 = vmatprep.subr.mxu0 0.0
  %315 = vmatpush1.xpose.msra.mxu0 0.0
  %316 = vmatprep.subr.mxu0 0.0
  %317 = vmatpush1.xpose.msra.mxu0 0.0
  %318 = vmatprep.subr.mxu0 0.0
  %319 = vmatpush1.xpose.msra.mxu0 0.0
  %320 = vmatprep.subr.mxu0 0.0
  %321 = vmatpush1.xpose.msra.mxu0 0.0
  %322 = vmatprep.subr.mxu0 0.0
  %323 = vmatpush1.xpose.msra.mxu0 0.0
  %324 = vmatprep.subr.mxu0 0.0
  %325 = vmatpush1.xpose.msra.mxu0 0.0
  %326 = vmatprep.subr.mxu0 0.0
  %327 = vmatpush1.xpose.msra.mxu0 0.0
  %328 = vmatprep.subr.mxu0 0.0
  %329 = vmatpush1.xpose.msra.mxu0 0.0
  %330 = vmatprep.subr.mxu0 0.0
  %331 = vmatpush1.xpose.msra.mxu0 0.0
  %332 = vmatprep.subr.mxu0 0.0
  %333 = vmatpush1.xpose.msra.mxu0 0.0
  %334 = vmatprep.subr.mxu0 0.0
  %335 = vmatpush1.xpose.msra.mxu0 0.0
  %336 = vmatprep.subr.mxu0 0.0
  %337 = vmatpush1.xpose.msra.mxu0 0.0
  %338 = vmatprep.subr.mxu0 0.0
  %339 = vmatpush1.xpose.msra.mxu0 0.0
  %340 = vmatprep.subr.mxu0 0.0
  %341 = vmatpush1.xpose.msra.mxu0 0.0
  %342 = vmatprep.subr.mxu0 0.0
  %343 = vmatpush1.xpose.msra.mxu0 0.0
  %344 = vmatprep.subr.mxu0 0.0
  %345 = vmatpush1.xpose.msra.mxu0 0.0
  %346 = vmatprep.subr.mxu0 0.0
  %347 = vmatpush1.xpose.msra.mxu0 0.0
  %348 = vmatprep.subr.mxu0 0.0
  %349 = vmatpush1.xpose.msra.mxu0 0.0
  %350 = vmatprep.subr.mxu0 0.0
  %351 = vmatpush1.xpose.msra.mxu0 0.0
  %352 = vmatprep.subr.mxu0 0.0
  %353 = vmatpush1.xpose.msra.mxu0 0.0
  %354 = vmatprep.subr.mxu0 0.0
  %355 = vmatpush1.xpose.msra.mxu0 0.0
  %356 = vmatprep.subr.mxu0 0.0
  %357 = vmatpush1.xpose.msra.mxu0 0.0
  %358 = vmatprep.mubr.f32.mxu0 0.0
  %359 = vmatmul.mubr.f32.gmra.mrb[0].mxu0 %v280
  %v360 = vpop.f32.mrb[0].mxu0
  %v361 = vadd.f32 0.0, %v360
  %v362 = vpop.f32.mrb[0].mxu0
  %363 = vdwg.mxu0
  %v365 = vrot.slane %v361, 2
  %v367 = vadd.f32 %v361, %v365
  %v368 = vxor.u32 %v367, 2147483648
  %v369 = vmul.f32 %v368, 1.442695
  %v370 = vpow.pop %v369
  %v371 = vadd.f32 %v370, 1.0
  %v372 = vrcp.pop %v371
  %v373 = vmul.f32 1.0, %v372
  %v374 = vlaneseq
  %v375 = vshrl.u32 %v374, 7
  %v376 = vsub.s32 0, %v375
  %v377 = vrot.slane %v373, %v376
  %379 = vbcast.lane.b32.xlu0 %v377, 256
  %v380 = vpop.permute.xlu0 %379
  %s382 = sor.u32 256, 8
  %383 = vbcast.lane.b32.xlu0 %v377, %s382
  %v384 = vpop.permute.xlu0 %383
  %s386 = sor.u32 256, 16
  %387 = vbcast.lane.b32.xlu0 %v377, %s386
  %v388 = vpop.permute.xlu0 %387
  %s390 = sor.u32 256, 24
  %391 = vbcast.lane.b32.xlu0 %v377, %s390
  %v392 = vpop.permute.xlu0 %391
  %v393 = vlaneseq
  %v394 = vshrl.u32 %v393, 7
  %v395 = vsub.s32 1, %v394
  %v396 = vrot.slane %v373, %v395
  %398 = vbcast.lane.b32.xlu0 %v396, 256
  %v399 = vpop.permute.xlu0 %398
  %s401 = sor.u32 256, 8
  %402 = vbcast.lane.b32.xlu0 %v396, %s401
  %v403 = vpop.permute.xlu0 %402
  %s405 = sor.u32 256, 16
  %406 = vbcast.lane.b32.xlu0 %v396, %s405
  %v407 = vpop.permute.xlu0 %406
  %s409 = sor.u32 256, 24
  %410 = vbcast.lane.b32.xlu0 %v396, %s409
  %v411 = vpop.permute.xlu0 %410
  %v412 = vmul.f32 %v14, %v380
  %v413 = vmul.f32 %v15, %v380
  %v414 = vmul.f32 %v16, %v384
  %v415 = vmul.f32 %v17, %v384
  %v416 = vmul.f32 %v18, %v388
  %v417 = vmul.f32 %v19, %v388
  %v418 = vmul.f32 %v20, %v392
  %v419 = vmul.f32 %v21, %v392
  %v420 = vmul.f32 %v22, %v399
  %v421 = vmul.f32 %v23, %v399
  %v422 = vmul.f32 %v24, %v403
  %v423 = vmul.f32 %v25, %v403
  %v424 = vmul.f32 %v26, %v407
  %v425 = vmul.f32 %v27, %v407
  %v426 = vmul.f32 %v28, %v411
  %v427 = vmul.f32 %v29, %v411
  %428 = vst [vmem:[%s3] sm:$0xff] %v412
  %429 = vst [vmem:[%s3 + $0x8] sm:$0xff] %v413
  %430 = vst [vmem:[%s3 + $0x10] sm:$0xff] %v414
  %431 = vst [vmem:[%s3 + $0x18] sm:$0xff] %v415
  %432 = vst [vmem:[%s3 + $0x20] sm:$0xff] %v416
  %433 = vst [vmem:[%s3 + $0x28] sm:$0xff] %v417
  %434 = vst [vmem:[%s3 + $0x30] sm:$0xff] %v418
  %435 = vst [vmem:[%s3 + $0x38] sm:$0xff] %v419
  %436 = vst [vmem:[%s3 + $0x40] sm:$0xff] %v420
  %437 = vst [vmem:[%s3 + $0x48] sm:$0xff] %v421
  %438 = vst [vmem:[%s3 + $0x50] sm:$0xff] %v422
  %439 = vst [vmem:[%s3 + $0x58] sm:$0xff] %v423
  %440 = vst [vmem:[%s3 + $0x60] sm:$0xff] %v424
  %441 = vst [vmem:[%s3 + $0x68] sm:$0xff] %v425
  %442 = vst [vmem:[%s3 + $0x70] sm:$0xff] %v426
  %443 = vst [vmem:[%s3 + $0x78] sm:$0xff] %v427
  // Predicated region
  $region14: #{channel_attention.1} parent=0 // pred_check
    _
  $region15: #{channel_attention.1} parent=0 // pred_check_branch
    %445 = sbr.rel (0) target = $region17
  $region16: #{channel_attention.1} parent=0 // pred_region
    _
  $region17: #{channel_attention.1} parent=0 // pred_fallthru
    _
  // Predicated region
  $region18: #{channel_attention.1} parent=0 // pred_check
    _
  $region19: #{channel_attention.1} parent=0 // pred_check_branch
    %447 = sbr.rel (0) target = $region21
  $region20: #{channel_attention.1} parent=0 // pred_region
    _
  $region21: #{channel_attention.1} parent=0 // pred_fallthru
    _

</llo_original>
